<compile_context>
chip_gen: v5e
topology: v5e:2x2
jax: 0.10.0
libtpu: 0.0.40
codegen_flags: <defaults>
</compile_context>

<pallas_src>
import functools

import jax
import jax.numpy as jnp
from jax import lax
from jax.experimental import pallas as pl
from jax.experimental.pallas import tpu as pltpu

LANES = 128
SUBLANES = 8
SUBLANE_ROUND = 16            # row rounding safe for f32 / bf16 / int8 sublane packing
DEFAULT_BLOCK_ROWS = 8192     # (8192, 128) f32 = 4 MiB per stream per pipeline buffer
DEFAULT_CHUNK_ROWS = 1024     # in-block chunk -> intermediates stay at 512 KiB each


def _round_up(x, m):
    return ((x + m - 1) // m) * m


def _num_tensorcores():
    # Best-effort detection of TensorCores per device (v7x has 2).  Any value
    # is *correct*; it only affects how the reduction is sharded.
    try:
        return max(1, min(2, int(getattr(jax.devices()[0], "num_cores", 1))))
    except Exception:
        return 1


def _balanced_loss_kernel(x_ref, t_ref, out_ref, *,
                          alpha0, alpha1, use_alpha, hard_targets,
                          inv_n, n_valid,
                          row_tile, chunk_rows, n_chunks,
                          blocks_per_core, needs_mask):
    j = pl.program_id(0)          # "parallel" (per-TensorCore) axis
    k = pl.program_id(1)          # "arbitrary" reduction axis

    # out_ref is this core's resident (8,128) f32 accumulator (same output
    # block index across the whole k axis).
    @pl.when(k == 0)
    def _():
        out_ref[...] = jnp.zeros_like(out_ref)

    logical_block = j * blocks_per_core + k

    def chunk_body(c, carry):
        r0 = pl.multiple_of(c * chunk_rows, chunk_rows)
        p = x_ref[pl.ds(r0, chunk_rows), :].astype(jnp.float32)
        t = t_ref[pl.ds(r0, chunk_rows), :].astype(jnp.float32)

        if hard_targets:
            # Opt-in fast path for strictly binary targets: one log per element.
            hot = t > 0.5
            q = jnp.where(hot, p, 1.0 - p)
            ce = -jnp.maximum(jnp.log(q), -100.0)
            if use_alpha:
                ce = ce * jnp.where(hot, alpha1, alpha0)
        else:
            # Faithful torch BCE (supports soft targets), with clamp at -100.
            log_p = jnp.maximum(jnp.log(p), -100.0)
            log_1mp = jnp.maximum(jnp.log(1.0 - p), -100.0)
            ce = -(log_1mp + t * (log_p - log_1mp))
            if use_alpha:
                ce = ce * (alpha0 + (alpha1 - alpha0) * t)

        if needs_mask:
            # Zero out elements past the true element count: covers the
            # undefined tail of a partial last block and any fully-clamped
            # over-allocated per-core block.  Must be a select on `ce`
            # (garbage may be Inf/NaN after the log).
            base = (logical_block * row_tile + c * chunk_rows) * LANES
            row_id = lax.broadcasted_iota(jnp.int32, (chunk_rows, LANES), 0)
            lane_id = lax.broadcasted_iota(jnp.int32, (chunk_rows, LANES), 1)
            idx = base + row_id * LANES + lane_id
            ce = jnp.where(idx < n_valid, ce, 0.0)

        # Fold (chunk_rows, 128) into the vreg-shaped (8,128) accumulator:
        # pure VPU adds across whole (8,128) tiles, no per-chunk XLU reduce.
        out_ref[...] += ce.reshape(-1, SUBLANES, LANES).sum(axis=0)
        return carry

    lax.fori_loop(0, n_chunks, chunk_body, 0)

    @pl.when(k == pl.num_programs(1) - 1)
    def _():
        out_ref[...] = out_ref[...] * inv_n


def balanced_loss(inputs, targets, alpha=None, *, hard_targets=False,
                  block_rows=DEFAULT_BLOCK_ROWS, chunk_rows=DEFAULT_CHUNK_ROWS,
                  num_cores=None):
    """Mean of (optionally alpha-weighted) elementwise BCE, computed in Pallas.

    Inputs/targets are read in their native storage dtype (prefer bf16 inputs /
    bf16-or-int8 targets at the call site: the kernel is HBM-bandwidth bound and
    upcasts to f32 on the load path).  `hard_targets=True` is an opt-in fast
    path valid only for strictly binary targets.
    """
    assert inputs.shape == targets.shape
    n = inputs.size
    assert n > 0

    if alpha is None:
        alpha0, alpha1, use_alpha = 1.0, 1.0, False
    else:
        alpha0, alpha1, use_alpha = float(alpha[0]), float(alpha[1]), True

    if num_cores is None:
        num_cores = _num_tensorcores()
    num_cores = max(1, int(num_cores))

    x = inputs.reshape(-1)
    t = targets.reshape(-1)

    # Lane padding only when strictly required for the (rows, 128) reshape
    # (at most 127 zero elements, which contribute exactly 0 under the clamp).
    # Unlike the previous version we never pad up to a full row tile; partial
    # tail blocks are masked inside the kernel instead.
    rem = n % LANES
    if rem:
        x = jnp.pad(x, (0, LANES - rem))
        t = jnp.pad(t, (0, LANES - rem))
    rows = x.size // LANES
    x2 = x.reshape(rows, LANES)
    t2 = t.reshape(rows, LANES)

    # --- tiling ---------------------------------------------------------
    chunk = max(SUBLANE_ROUND,
                (min(chunk_rows, block_rows) // SUBLANE_ROUND) * SUBLANE_ROUND)
    if rows <= chunk:
        chunk = _round_up(rows, SUBLANE_ROUND)
        row_tile = chunk
    else:
        row_tile = min(_round_up(block_rows, chunk), _round_up(rows, chunk))
    n_chunks = row_tile // chunk

    num_blocks = pl.cdiv(rows, row_tile)
    num_cores = max(1, min(num_cores, num_blocks))   # never more cores than blocks
    blocks_per_core = pl.cdiv(num_blocks, num_cores)
    # Overhanging logical blocks (uneven core split / partial last block) are
    # clamped onto the last real block in the index_map and fully masked out.
    needs_mask = (num_cores * blocks_per_core * row_tile) > rows

    kernel = functools.partial(
        _balanced_loss_kernel,
        alpha0=alpha0, alpha1=alpha1, use_alpha=use_alpha,
        hard_targets=hard_targets,
        inv_n=1.0 / n, n_valid=n,
        row_tile=row_tile, chunk_rows=chunk, n_chunks=n_chunks,
        blocks_per_core=blocks_per_core, needs_mask=needs_mask)

    def in_map(j, k):
        return (jnp.minimum(j * blocks_per_core + k, num_blocks - 1), 0)

    cost = pl.CostEstimate(
        flops=8 * n,
        transcendentals=(1 if hard_targets else 2) * n,
        bytes_accessed=n * (x2.dtype.itemsize + t2.dtype.itemsize)
        + num_cores * SUBLANES * LANES * 4)

    partials = pl.pallas_call(
        kernel,
        out_shape=jax.ShapeDtypeStruct((num_cores, SUBLANES, LANES), jnp.float32),
        grid_spec=pltpu.PrefetchScalarGridSpec(
            num_scalar_prefetch=0,
            grid=(num_cores, blocks_per_core),
            in_specs=[
                pl.BlockSpec((row_tile, LANES), in_map),
                pl.BlockSpec((row_tile, LANES), in_map),
            ],
            # Per-core (8,128) accumulator block, squeezed leading dim;
            # constant across k -> stays resident in VMEM for the reduction.
            out_specs=pl.BlockSpec((None, SUBLANES, LANES), lambda j, k: (j, 0, 0)),
        ),
        compiler_params=pltpu.CompilerParams(
            dimension_semantics=("parallel", "arbitrary")),
        cost_estimate=cost,
    )(x2, t2)

    # Tiny final reduce over the per-core (8,128) partials (already * 1/n).
    return jnp.sum(partials)


def balanced_loss_ref(inputs, targets, alpha=None):
    p = inputs.astype(jnp.float32)
    t = targets.astype(jnp.float32)
    ce = -(t * jnp.maximum(jnp.log(p), -100.0)
           + (1.0 - t) * jnp.maximum(jnp.log(1.0 - p), -100.0))
    if alpha is not None:
        ce = (alpha[1] * t + alpha[0] * (1 - t)) * ce
    return jnp.mean(ce)


if __name__ == "__main__":
    key = jax.random.PRNGKey(0)
    k1, k2, k3, k4, k5, k6, k7, k8 = jax.random.split(key, 8)

    alpha = (0.25, 0.75)

    # 1) Default path: small NCHW-shaped input, f32, alpha weighting.
    shape = (2, 4, 16, 16)
    inputs = jax.nn.sigmoid(jax.random.normal(k1, shape, jnp.float32))
    targets = (jax.random.uniform(k2, shape) > 0.5).astype(jnp.float32)
    out = jax.block_until_ready(balanced_loss(inputs, targets, alpha=alpha))
    ref = balanced_loss_ref(inputs, targets, alpha=alpha)
    assert jnp.allclose(out, ref, rtol=1e-5, atol=1e-6), (out, ref)

    # 2) alpha=None path (weighting ops statically skipped).
    out2 = jax.block_until_ready(balanced_loss(inputs, targets, alpha=None))
    ref2 = balanced_loss_ref(inputs, targets, alpha=None)
    assert jnp.allclose(out2, ref2, rtol=1e-5, atol=1e-6), (out2, ref2)

    # 3) n not a multiple of 128: lane-pad + in-kernel tail mask, soft targets.
    shape3 = (3, 5, 7, 11)   # n = 1155
    inputs3 = jax.nn.sigmoid(jax.random.normal(k3, shape3, jnp.float32))
    targets3 = jax.random.uniform(k4, shape3, jnp.float32)
    out3 = jax.block_until_ready(balanced_loss(inputs3, targets3, alpha=alpha))
    ref3 = balanced_loss_ref(inputs3, targets3, alpha=alpha)
    assert jnp.allclose(out3, ref3, rtol=1e-5, atol=1e-6), (out3, ref3)

    # 4) Multi-block reduction + 2-core split with an odd block count
    #    (exercises index_map clamping + full masking of the extra block).
    shape4 = (5, 4, 16, 16)  # n = 5120 -> rows = 40 -> 3 blocks of 16 rows
    inputs4 = jax.nn.sigmoid(jax.random.normal(k5, shape4, jnp.float32))
    targets4 = (jax.random.uniform(k6, shape4) > 0.5).astype(jnp.float32)
    out4 = jax.block_until_ready(
        balanced_loss(inputs4, targets4, alpha=alpha,
                      block_rows=16, chunk_rows=16, num_cores=2))
    ref4 = balanced_loss_ref(inputs4, targets4, alpha=alpha)
    assert jnp.allclose(out4, ref4, rtol=1e-5, atol=1e-6), (out4, ref4)

    # 5) Multi-chunk in-block loop (row_tile > chunk) + 2-core split, no mask.
    shape5 = (2, 4, 32, 64)  # n = 16384 -> rows = 128
    inputs5 = jax.nn.sigmoid(jax.random.normal(k7, shape5, jnp.float32))
    targets5 = (jax.random.uniform(k8, shape5) > 0.5).astype(jnp.float32)
    out5 = jax.block_until_ready(
        balanced_loss(inputs5, targets5, alpha=alpha,
                      block_rows=64, chunk_rows=16, num_cores=2))
    ref5 = balanced_loss_ref(inputs5, targets5, alpha=alpha)
    assert jnp.allclose(out5, ref5, rtol=1e-5, atol=1e-6), (out5, ref5)

    # 6) Native bf16 storage path (halves HBM reads; kernel upcasts to f32).
    out6 = jax.block_until_ready(
        balanced_loss(inputs.astype(jnp.bfloat16), targets.astype(jnp.bfloat16),
                      alpha=alpha))
    ref6 = balanced_loss_ref(inputs.astype(jnp.bfloat16),
                             targets.astype(jnp.bfloat16), alpha=alpha)
    assert jnp.allclose(out6, ref6, rtol=1e-4, atol=1e-5), (out6, ref6)

    # 7) Opt-in hard-targets fast path (single log) with strictly binary labels.
    out7 = jax.block_until_ready(
        balanced_loss(inputs, targets, alpha=alpha, hard_targets=True))
    assert jnp.allclose(out7, ref, rtol=1e-5, atol=1e-6), (out7, ref)

    print("KERNEL_OK")
</pallas_src>

<mosaic_0001>
module attributes {stable_mosaic.version = 11 : i64} {
  func.func @_balanced_loss_kernel(%arg0: i32, %arg1: i32, %arg2: memref<16x128xf32, #tpu.memory_space<vmem>>, %arg3: memref<16x128xf32, #tpu.memory_space<vmem>>, %arg4: memref<1x8x128xf32, #tpu.memory_space<vmem>>) attributes {dimension_semantics = [#tpu.dimension_semantics<parallel>, #tpu.dimension_semantics<arbitrary>], iteration_bounds = array<i64: 1, 1>, scalar_prefetch = 0 : i64, scratch_operands = 0 : i64, tpu.core_type = #tpu.core_type<tc>, window_params = [{transform_indices = @transform_0, window_bounds = array<i64: 16, 128>}, {transform_indices = @transform_1, window_bounds = array<i64: 16, 128>}, {transform_indices = @transform_2, window_bounds = array<i64: 1, 8, 128>}]} {
    %c0_i32 = arith.constant 0 : i32
    %0 = arith.cmpi eq, %arg1, %c0_i32 : i32
    %1 = arith.extui %0 : i1 to i32
    %c0_i32_0 = arith.constant 0 : i32
    %2 = arith.cmpi ne, %1, %c0_i32_0 : i32
    scf.if %2 {
      %cst_17 = arith.constant 0.000000e+00 : f32
      %38 = vector.broadcast %cst_17 : f32 to vector<8x128xf32>
      %c0_18 = arith.constant 0 : index
      %c0_19 = arith.constant 0 : index
      %c0_20 = arith.constant 0 : index
      %39 = vector.load %arg4[%c0_18, %c0_19, %c0_20] : memref<1x8x128xf32, #tpu.memory_space<vmem>>, vector<1x8x128xf32>
      %40 = vector.shape_cast %39 : vector<1x8x128xf32> to vector<8x128xf32>
      %41 = vector.shape_cast %38 : vector<8x128xf32> to vector<1x8x128xf32>
      tpu.vector_store %arg4[%c0_18, %c0_19, %c0_20], %41 {strides = array<i32>} : memref<1x8x128xf32, #tpu.memory_space<vmem>>, vector<1x8x128xf32>,
    } else {
    }
    %c0_i32_1 = arith.constant 0 : i32
    %c16_i32 = arith.constant 16 : i32
    %3 = arith.muli %c0_i32_1, %c16_i32 : i32
    %4 = tpu.assume_multiple %3, 16 : i32
    %5 = arith.index_cast %4 : i32 to index
    %c0 = arith.constant 0 : index
    %6 = vector.load %arg2[%5, %c0] : memref<16x128xf32, #tpu.memory_space<vmem>>, vector<16x128xf32>
    %7 = arith.index_cast %4 : i32 to index
    %c0_2 = arith.constant 0 : index
    %8 = vector.load %arg3[%7, %c0_2] : memref<16x128xf32, #tpu.memory_space<vmem>>, vector<16x128xf32>
    %9 = math.log %6 : vector<16x128xf32>
    %cst = arith.constant -1.000000e+02 : f32
    %10 = vector.broadcast %cst : f32 to vector<16x128xf32>
    %11 = arith.maximumf %9, %10 : vector<16x128xf32>
    %cst_3 = arith.constant 1.000000e+00 : f32
    %12 = vector.broadcast %cst_3 : f32 to vector<16x128xf32>
    %13 = arith.subf %12, %6 : vector<16x128xf32>
    %14 = math.log %13 : vector<16x128xf32>
    %cst_4 = arith.constant -1.000000e+02 : f32
    %15 = vector.broadcast %cst_4 : f32 to vector<16x128xf32>
    %16 = arith.maximumf %14, %15 : vector<16x128xf32>
    %17 = arith.subf %11, %16 : vector<16x128xf32>
    %18 = arith.mulf %8, %17 : vector<16x128xf32>
    %19 = arith.addf %16, %18 : vector<16x128xf32>
    %cst_5 = arith.constant 0.000000e+00 : f32
    %20 = vector.broadcast %cst_5 : f32 to vector<16x128xf32>
    %21 = arith.subf %20, %19 : vector<16x128xf32>
    %cst_6 = arith.constant 5.000000e-01 : f32
    %22 = vector.broadcast %cst_6 : f32 to vector<16x128xf32>
    %23 = arith.mulf %22, %8 : vector<16x128xf32>
    %cst_7 = arith.constant 2.500000e-01 : f32
    %24 = vector.broadcast %cst_7 : f32 to vector<16x128xf32>
    %25 = arith.addf %24, %23 : vector<16x128xf32>
    %26 = arith.mulf %21, %25 : vector<16x128xf32>
    %c0_8 = arith.constant 0 : index
    %c0_9 = arith.constant 0 : index
    %c0_10 = arith.constant 0 : index
    %27 = vector.load %arg4[%c0_8, %c0_9, %c0_10] : memref<1x8x128xf32, #tpu.memory_space<vmem>>, vector<1x8x128xf32>
    %28 = vector.shape_cast %27 : vector<1x8x128xf32> to vector<8x128xf32>
    %29 = vector.shape_cast %26 : vector<16x128xf32> to vector<2x8x128xf32>
    %cst_11 = arith.constant dense<0.000000e+00> : vector<8x128xf32>
    %30 = vector.multi_reduction <add>, %29, %cst_11 [0] : vector<2x8x128xf32> to vector<8x128xf32>
    %31 = arith.addf %28, %30 : vector<8x128xf32>
    %c0_12 = arith.constant 0 : index
    %c0_13 = arith.constant 0 : index
    %c0_14 = arith.constant 0 : index
    %32 = vector.load %arg4[%c0_12, %c0_13, %c0_14] : memref<1x8x128xf32, #tpu.memory_space<vmem>>, vector<1x8x128xf32>
    %33 = vector.shape_cast %32 : vector<1x8x128xf32> to vector<8x128xf32>
    %34 = vector.shape_cast %31 : vector<8x128xf32> to vector<1x8x128xf32>
    tpu.vector_store %arg4[%c0_12, %c0_13, %c0_14], %34 {strides = array<i32>} : memref<1x8x128xf32, #tpu.memory_space<vmem>>, vector<1x8x128xf32>,
    %c1_i32 = arith.constant 1 : i32
    %c0_i32_15 = arith.constant 0 : i32
    %35 = arith.cmpi eq, %arg1, %c0_i32_15 : i32
    %36 = arith.extui %35 : i1 to i32
    %c0_i32_16 = arith.constant 0 : i32
    %37 = arith.cmpi ne, %36, %c0_i32_16 : i32
    scf.if %37 {
      %c0_17 = arith.constant 0 : index
      %c0_18 = arith.constant 0 : index
      %c0_19 = arith.constant 0 : index
      %38 = vector.load %arg4[%c0_17, %c0_18, %c0_19] : memref<1x8x128xf32, #tpu.memory_space<vmem>>, vector<1x8x128xf32>
      %39 = vector.shape_cast %38 : vector<1x8x128xf32> to vector<8x128xf32>
      %cst_20 = arith.constant 4.8828125E-4 : f32
      %40 = vector.broadcast %cst_20 : f32 to vector<8x128xf32>
      %41 = arith.mulf %39, %40 : vector<8x128xf32>
      %c0_21 = arith.constant 0 : index
      %c0_22 = arith.constant 0 : index
      %c0_23 = arith.constant 0 : index
      %42 = vector.load %arg4[%c0_21, %c0_22, %c0_23] : memref<1x8x128xf32, #tpu.memory_space<vmem>>, vector<1x8x128xf32>
      %43 = vector.shape_cast %42 : vector<1x8x128xf32> to vector<8x128xf32>
      %44 = vector.shape_cast %41 : vector<8x128xf32> to vector<1x8x128xf32>
      tpu.vector_store %arg4[%c0_21, %c0_22, %c0_23], %44 {strides = array<i32>} : memref<1x8x128xf32, #tpu.memory_space<vmem>>, vector<1x8x128xf32>,
    } else {
    }
    return
  }
  func.func @transform_0(%arg0: i32, %arg1: i32) -> (i32, i32) {
    %c1_i32 = arith.constant 1 : i32
    %0 = arith.muli %arg0, %c1_i32 : i32
    %1 = arith.addi %0, %arg1 : i32
    %c0_i32 = arith.constant 0 : i32
    %2 = arith.minsi %1, %c0_i32 : i32
    %c0_i32_0 = arith.constant 0 : i32
    %c0_i32_1 = arith.constant 0 : i32
    return %2, %c0_i32_0 : i32, i32
  }
  func.func @transform_1(%arg0: i32, %arg1: i32) -> (i32, i32) {
    %c1_i32 = arith.constant 1 : i32
    %0 = arith.muli %arg0, %c1_i32 : i32
    %1 = arith.addi %0, %arg1 : i32
    %c0_i32 = arith.constant 0 : i32
    %2 = arith.minsi %1, %c0_i32 : i32
    %c0_i32_0 = arith.constant 0 : i32
    %c0_i32_1 = arith.constant 0 : i32
    return %2, %c0_i32_0 : i32, i32
  }
  func.func @transform_2(%arg0: i32, %arg1: i32) -> (i32, i32, i32) {
    %c0_i32 = arith.constant 0 : i32
    %c0_i32_0 = arith.constant 0 : i32
    %c0_i32_1 = arith.constant 0 : i32
    return %arg0, %c0_i32, %c0_i32_0 : i32, i32, i32
  }
}

</mosaic_0001>

<llo_original>
// kernel: tpu_custom_call.1
$region0: #{tpu_custom_call.1}
  #allocation0 [shape = 'u32[]', space=smem, size = 0x4, offset = 0x4, fixed_abs, tag = 'smem constant byte address 0x4 - core index']
  #allocation1 [shape = 'u32[72,128]{1,0:T(1,128)}', space=vmem, size = 0x9000, scoped, tag = 'internal scratch']
  %s0 = inlined_call_operand.hbm [shape: f32[16,128], index: 0, kind: input, shape index: {}]
  %s1 = inlined_call_operand.hbm [shape: f32[16,128], index: 1, kind: input, shape index: {}]
  %s2 = inlined_call_operand.hbm [shape: f32[1,8,128], index: 2, kind: output, shape index: {}]
  %s3 = sld [smem:[#allocation0]]
  $region34: #{tpu_custom_call.1} parent=0
    _
  %s5 = ssub.s32 1, %s3
  %s6 = scalar_select 0, %s5, %s3
  $region1: #{tpu_custom_call.1} parent=0
    #allocation2 [shape = 'u8[8192]{0}', space=vmem, size = 0x2000, scoped, tag = 'input window, operand 0, single buffered']
    #allocation3 [shape = 's32[1]{0}', space=sflag, size = 0x4, scoped, tag = 'scoped memory for tpu_custom_call.1']
    #allocation4 [shape = 's32[1]{0}', space=sflag, size = 0x4, scoped, tag = 'scoped memory for tpu_custom_call.1']
    #allocation5 [shape = 'u8[8192]{0}', space=vmem, size = 0x2000, scoped, tag = 'input window, operand 1, single buffered']
    #allocation6 [shape = 's32[1]{0}', space=sflag, size = 0x4, scoped, tag = 'scoped memory for tpu_custom_call.1']
    #allocation7 [shape = 'u8[4096]{0}', space=vmem, size = 0x1000, scoped, tag = 'output window, operand 0, single buffered']
    %7 = vsyncpa [#allocation3], 0
    %8 = vsyncpa [#allocation6], 0
    %9 = vsyncpa [#allocation4], 0
    // Predicated region
    $region2: #{tpu_custom_call.1} parent=1 // pred_check
      _
    $region3: #{tpu_custom_call.1} parent=1 // pred_check_branch
      %11 = sbr.rel (0) target = $region5
    $region4: #{tpu_custom_call.1} parent=1 // pred_region
      %s12 = sadd.s32 0, 0
      %p13 = scmp.lt.s32.totalorder %s12, 0
      %s14 = scalar_select %p13, %s12, 0
      %s15 = smul.u32 2, %s14
      %17 = vsyncadd [#allocation3], 0
      %s18 = smul.addr %s15, 8
      %s19 = scalar_lea.hbm %s0, %s18
      %s20 = sshll.u32 %s19, 4
      %s21 = int_to_ptr.hbm [resolvable:$true] %s20
      %s22 = sshll.u32 [#allocation2], 4
      %s23 = int_to_ptr.vmem [resolvable:$true] %s22
      %28 = dma.hbm_to_vmem [thread:$0]  %s21, 256, %s23, [#allocation3], 128, 128, 8
    $region5: #{tpu_custom_call.1} parent=1 // pred_fallthru
      _
    // Predicated region
    $region6: #{tpu_custom_call.1} parent=1 // pred_check
      _
    $region7: #{tpu_custom_call.1} parent=1 // pred_check_branch
      %30 = sbr.rel (0) target = $region9
    $region8: #{tpu_custom_call.1} parent=1 // pred_region
      %s31 = sadd.s32 0, 0
      %p32 = scmp.lt.s32.totalorder %s31, 0
      %s33 = scalar_select %p32, %s31, 0
      %s34 = smul.u32 2, %s33
      %36 = vsyncadd [#allocation6], 0
      %s37 = smul.addr %s34, 8
      %s38 = scalar_lea.hbm %s1, %s37
      %s39 = sshll.u32 %s38, 4
      %s40 = int_to_ptr.hbm [resolvable:$true] %s39
      %s41 = sshll.u32 [#allocation5], 4
      %s42 = int_to_ptr.vmem [resolvable:$true] %s41
      %47 = dma.hbm_to_vmem [thread:$0]  %s40, 256, %s42, [#allocation6], 128, 128, 8
    $region9: #{tpu_custom_call.1} parent=1 // pred_fallthru
      _
    // Predicated region
    $region10: #{tpu_custom_call.1} parent=1 // pred_check
      _
    $region11: #{tpu_custom_call.1} parent=1 // pred_check_branch
      %49 = sbr.rel (0) target = $region13
    $region12: #{tpu_custom_call.1} parent=1 // pred_region
      %51 = dma.done [#allocation3], 256
    $region13: #{tpu_custom_call.1} parent=1 // pred_fallthru
      _
    // Predicated region
    $region14: #{tpu_custom_call.1} parent=1 // pred_check
      _
    $region15: #{tpu_custom_call.1} parent=1 // pred_check_branch
      %53 = sbr.rel (0) target = $region17
    $region16: #{tpu_custom_call.1} parent=1 // pred_region
      %55 = dma.done [#allocation6], 256
    $region17: #{tpu_custom_call.1} parent=1 // pred_fallthru
      _
    %s56 = sadd.s32 0, 0
    %p57 = scmp.lt.s32.totalorder %s56, 0
    %s58 = scalar_select %p57, %s56, 0
    %s59 = smul.u32 2, %s58
    %s60 = sadd.s32 0, 0
    %p61 = scmp.lt.s32.totalorder %s60, 0
    %s62 = scalar_select %p61, %s60, 0
    %s63 = smul.u32 2, %s62
    %p64 = scmp.eq.s32.totalorder 0, 0
    // Predicated region
    $region18: #{tpu_custom_call.1} parent=1 // pred_check
      %p65 = pneg %p64
    $region19: #{tpu_custom_call.1} parent=1 // pred_check_branch
      %67 = sbr.rel (%p65) target = $region21
    $region20: #{tpu_custom_call.1} parent=1 // pred_region
      %68 = vst [vmem:[#allocation7] sm:$0xff] 0.0
    $region21: #{tpu_custom_call.1} parent=1 // pred_fallthru
      _
    %v69 = vld [vmem:[#allocation2] sm:$0xff]
    %v70 = vld [vmem:[#allocation2 + $0x8] sm:$0xff]
    %v71 = vld [vmem:[#allocation5] sm:$0xff]
    %v72 = vld [vmem:[#allocation5 + $0x8] sm:$0xff]
    %v73 = vlog2.pop %v69
    %v74 = vmul.f32 %v73, 0.6931472
    %v75 = vlog2.pop %v70
    %v76 = vmul.f32 %v75, 0.6931472
    %v77 = vmax.f32 %v74, -100.0
    %v78 = vmax.f32 %v76, -100.0
    %v79 = vsub.f32 1.0, %v69
    %v80 = vsub.f32 1.0, %v70
    %v81 = vlog2.pop %v79
    %v82 = vmul.f32 %v81, 0.6931472
    %v83 = vlog2.pop %v80
    %v84 = vmul.f32 %v83, 0.6931472
    %v85 = vmax.f32 %v82, -100.0
    %v86 = vmax.f32 %v84, -100.0
    %v87 = vsub.f32 %v77, %v85
    %v88 = vsub.f32 %v78, %v86
    %v89 = vmul.f32 %v71, %v87
    %v90 = vmul.f32 %v72, %v88
    %v91 = vadd.f32 %v85, %v89
    %v92 = vadd.f32 %v86, %v90
    %v93 = vsub.f32 0.0, %v91
    %v94 = vsub.f32 0.0, %v92
    %v95 = vmul.f32 %v71, 0.5
    %v96 = vmul.f32 %v72, 0.5
    %v97 = vadd.f32 %v95, 0.25
    %v98 = vadd.f32 %v96, 0.25
    %v99 = vmul.f32 %v93, %v97
    %v100 = vmul.f32 %v94, %v98
    %v101 = vld [vmem:[#allocation7] sm:$0xff]
    %v102 = vadd.f32 %v99, %v100
    %v103 = vadd.f32 %v101, %v102
    %104 = vst [vmem:[#allocation7] sm:$0xff] %v103
    // Predicated region
    $region22: #{tpu_custom_call.1} parent=1 // pred_check
      %p105 = pneg %p64
    $region23: #{tpu_custom_call.1} parent=1 // pred_check_branch
      %107 = sbr.rel (%p105) target = $region25
    $region24: #{tpu_custom_call.1} parent=1 // pred_region
      %v108 = vld [vmem:[#allocation7] sm:$0xff]
      %v109 = vmul.f32 %v108, 0.00048828125
      %110 = vst [vmem:[#allocation7] sm:$0xff] %v109
    $region25: #{tpu_custom_call.1} parent=1 // pred_fallthru
      _
    // Predicated region
    $region26: #{tpu_custom_call.1} parent=1 // pred_check
      _
    $region27: #{tpu_custom_call.1} parent=1 // pred_check_branch
      %112 = sbr.rel (0) target = $region29
    $region28: #{tpu_custom_call.1} parent=1 // pred_region
      %114 = vsyncadd [#allocation4], 0
      %s116 = sshll.u32 [#allocation7], 4
      %s117 = int_to_ptr.vmem [resolvable:$true] %s116
      %s118 = sshll.u32 %s2, 4
      %s119 = int_to_ptr.hbm [resolvable:$true] %s118
      %121 = dma.vmem_to_hbm [thread:$0]  %s117, 128, %s119, [#allocation4]
    $region29: #{tpu_custom_call.1} parent=1 // pred_fallthru
      _
    // Predicated region
    $region30: #{tpu_custom_call.1} parent=1 // pred_check
      _
    $region31: #{tpu_custom_call.1} parent=1 // pred_check_branch
      %123 = sbr.rel (0) target = $region33
    $region32: #{tpu_custom_call.1} parent=1 // pred_region
      %125 = dma.done [#allocation4], 128
    $region33: #{tpu_custom_call.1} parent=1 // pred_fallthru
      _
    %126 = vsyncpa [#allocation3], 1
    %127 = vsyncpa [#allocation6], 1
    %128 = vsyncpa [#allocation4], 1

</llo_original>
